<compile_context>
chip_gen: v7x
topology: tpu7x:2x2x1
jax: 0.10.0
libtpu: 0.0.40
codegen_flags: <defaults>
</compile_context>

<pallas_src>
import jax
import jax.numpy as jnp
from jax.experimental import pallas as pl
from jax.experimental.pallas import tpu as pltpu
from jax.scipy.linalg import block_diag

# Sizes implied by the module configuration.
N = 32             # nodes (set elements) per set
F_IN = 16          # input features
HIDDEN = 32        # hidden width of each MLP
F_OUT = 32         # output features of each MLP
HID2 = 2 * HIDDEN  # fused gamma|lambda hidden per set

# Batch tiling: TILE_B sets per grid step, batch laid out along lanes.
TILE_B = 8
IN_W = TILE_B * F_IN     # 128 input lanes per tile  (8*128 aligned)
HID_W = TILE_B * HID2    # 512 hidden lanes per tile
OUT_W = TILE_B * F_OUT   # 256 output lanes per tile (lane-dense store)

# Packed weight-slab layout (single f32 array, one DMA). Every piece starts on
# an 8-sublane boundary at lane offset 0 (or a 128-aligned lane offset).
SLAB_W = HID_W                        # 512 lanes
R_W1 = 0                              # rows [0,128)   : W1_big (block-diag [gW1|lW1])
R_B1 = TILE_B * F_IN                  # row 128        : tiled first-layer bias [gb1|lb1]
R_W2 = ((R_B1 + 1 + 7) // 8) * 8      # 136; rows [136,648): cols 0:256 W2G_big, cols 256:512 W2L_big
R_B2 = R_W2 + HID_W                   # 648            : folded bias (gb2+lb2), cols 0:256
R_TOTAL = ((R_B2 + 1 + 7) // 8) * 8   # 656 rows total


def deepsets_batched_kernel(x_ref, w_ref, o_ref):
    """Fused DeepSets forward for TILE_B sets laid out along lanes.

    x_ref : (N, TILE_B*F_IN)   -- set b occupies lanes [b*F_IN, (b+1)*F_IN)
    w_ref : (R_TOTAL, SLAB_W)  -- packed block-diagonal weights (see layout above)
    o_ref : (N, TILE_B*F_OUT)  -- set b occupies lanes [b*F_OUT, (b+1)*F_OUT)
    """
    x = x_ref[...]                                                  # (32, 128)

    # First layers of BOTH MLPs for all TILE_B sets: one MXU matmul.
    w1 = w_ref[R_W1:R_W1 + TILE_B * F_IN, :]                        # (128, 512)
    b1 = w_ref[pl.ds(R_B1, 1), :]                                   # (1, 512)
    h = jnp.dot(x, w1, preferred_element_type=jnp.float32) + b1
    h = jnp.maximum(h, 0.0)                                         # ReLU, (32, 512)

    # Second layers ("identity" activation, biases folded into b2 below).
    w2g = w_ref[R_W2:R_W2 + HID_W, 0:OUT_W]                         # (512, 256)
    w2l = w_ref[R_W2:R_W2 + HID_W, OUT_W:2 * OUT_W]                 # (512, 256)
    b2 = w_ref[pl.ds(R_B2, 1), 0:OUT_W]                             # (1, 256)

    g = jnp.dot(h, w2g, preferred_element_type=jnp.float32)         # gamma out (no bias)
    lam = jnp.dot(h, w2l, preferred_element_type=jnp.float32)       # lambda out (no bias)

    # Max-pool over the node axis; sets live in disjoint lane groups, so a
    # plain axis-0 max IS the per-set pool.  b2 = gb2 + lb2 (exact fold).
    pooled = jnp.max(g, axis=0, keepdims=True)                      # (1, 256)

    o_ref[...] = jnp.tanh(lam + pooled + b2)                        # (32, 256)


def prepare_deepsets_weights(gamma_params, lambda_params):
    """ONE-TIME weight prep (hoisted out of the forward path).

    Fuses the first layers, zero-pads + block-diag-replicates the second layers
    (TILE_B copies so TILE_B sets ride along the lane axis), folds gb2 into lb2
    and packs everything into a single 8-sublane-aligned f32 slab.
    """
    gw1, gb1, gw2, gb2 = gamma_params
    lw1, lb1, lw2, lb2 = lambda_params

    w1_cat = jnp.concatenate([gw1, lw1], axis=1)                    # (F_IN, 2H)
    b1_cat = jnp.concatenate([gb1, lb1], axis=1)                    # (1, 2H)
    w2_g = jnp.concatenate([gw2, jnp.zeros_like(lw2)], axis=0)      # (2H, F_OUT)
    w2_l = jnp.concatenate([jnp.zeros_like(gw2), lw2], axis=0)      # (2H, F_OUT)
    b2 = gb2 + lb2                                                  # (1, F_OUT)

    w1_big = block_diag(*([w1_cat] * TILE_B))                       # (128, 512)
    w2g_big = block_diag(*([w2_g] * TILE_B))                        # (512, 256)
    w2l_big = block_diag(*([w2_l] * TILE_B))                        # (512, 256)
    b1_big = jnp.tile(b1_cat, (1, TILE_B))[0]                       # (512,)
    b2_big = jnp.tile(b2, (1, TILE_B))[0]                           # (256,)

    slab = jnp.zeros((R_TOTAL, SLAB_W), jnp.float32)
    slab = slab.at[R_W1:R_W1 + TILE_B * F_IN, :].set(w1_big)
    slab = slab.at[R_B1, :].set(b1_big)
    slab = slab.at[R_W2:R_W2 + HID_W, 0:OUT_W].set(w2g_big)
    slab = slab.at[R_W2:R_W2 + HID_W, OUT_W:2 * OUT_W].set(w2l_big)
    slab = slab.at[R_B2, 0:OUT_W].set(b2_big)
    return slab


@jax.jit
def deepsets_forward(x, slab):
    """x: (B, N, F_IN) -- B independent sets.  Returns (B, N, F_OUT)."""
    b = x.shape[0]
    b_pad = ((b + TILE_B - 1) // TILE_B) * TILE_B
    if b_pad != b:
        # Padded sets are processed independently (pooling is per lane group),
        # so they never contaminate real sets; sliced off below.
        x = jnp.concatenate([x, jnp.zeros((b_pad - b, N, F_IN), x.dtype)], axis=0)

    # Layout plumbing: batch along lanes -> lane-dense kernel input/output.
    x_t = jnp.transpose(x, (1, 0, 2)).reshape(N, b_pad * F_IN)      # (32, B*16)

    grid = (b_pad // TILE_B,)
    out_t = pl.pallas_call(
        deepsets_batched_kernel,
        out_shape=jax.ShapeDtypeStruct((N, b_pad * F_OUT), jnp.float32),
        grid=grid,
        in_specs=[
            pl.BlockSpec((N, IN_W), lambda i: (0, i)),          # per-tile input
            pl.BlockSpec((R_TOTAL, SLAB_W), lambda i: (0, 0)),  # weights: fetched once
        ],
        out_specs=pl.BlockSpec((N, OUT_W), lambda i: (0, i)),   # 256-lane unmasked store
        compiler_params=pltpu.CompilerParams(
            dimension_semantics=("parallel",)),                 # both TCs on v7x
    )(x_t, slab)

    out = out_t.reshape(N, b_pad, F_OUT).transpose(1, 0, 2)         # (B_pad, N, F_OUT)
    return out[:b]

    # TODO(synk): unbatch()/ragged n_nodes per set from field_data is host-side
    # bookkeeping (here every set has N nodes); "mean" pool_operator would be a
    # one-line change (sum * 1/N) in the kernel.


def _init_linear(key, fan_in, fan_out):
    kw, kb = jax.random.split(key)
    lim = 1.0 / jnp.sqrt(jnp.float32(fan_in))
    w = jax.random.uniform(kw, (fan_in, fan_out), jnp.float32, -lim, lim)
    b = jax.random.uniform(kb, (1, fan_out), jnp.float32, -lim, lim)
    return w, b


def _reference(x, gamma_params, lambda_params):
    gw1, gb1, gw2, gb2 = gamma_params
    lw1, lb1, lw2, lb2 = lambda_params

    def one_set(xb):
        g = jnp.maximum(xb @ gw1 + gb1, 0.0) @ gw2 + gb2
        lam = jnp.maximum(xb @ lw1 + lb1, 0.0) @ lw2 + lb2
        return jnp.tanh(lam + jnp.max(g, axis=0, keepdims=True))

    return jax.vmap(one_set)(x)


if __name__ == "__main__":
    key = jax.random.PRNGKey(0)
    kx, kg1, kg2, kl1, kl2 = jax.random.split(key, 5)

    B = 16  # number of sets (2 grid steps of TILE_B=8)
    x = jax.random.normal(kx, (B, N, F_IN), jnp.float32)

    gw1, gb1 = _init_linear(kg1, F_IN, HIDDEN)
    gw2, gb2 = _init_linear(kg2, HIDDEN, F_OUT)
    lw1, lb1 = _init_linear(kl1, F_IN, HIDDEN)
    lw2, lb2 = _init_linear(kl2, HIDDEN, F_OUT)

    gamma_params = (gw1, gb1, gw2, gb2)
    lambda_params = (lw1, lb1, lw2, lb2)

    # One-time weight prep (NOT part of the per-call forward path).
    slab = jax.block_until_ready(prepare_deepsets_weights(gamma_params, lambda_params))

    out = deepsets_forward(x, slab)
    out = jax.block_until_ready(out)

    ref = _reference(x, gamma_params, lambda_params)
    assert out.shape == (B, N, F_OUT)
    assert jnp.allclose(out, ref, atol=5e-5, rtol=1e-5)

    print("KERNEL_OK")
</pallas_src>

<mosaic_0001>
module attributes {stable_mosaic.version = 11 : i64} {
  func.func @deepsets_batched_kernel(%arg0: i32, %arg1: memref<32x128xf32, #tpu.memory_space<vmem>>, %arg2: memref<656x512xf32, #tpu.memory_space<vmem>>, %arg3: memref<32x256xf32, #tpu.memory_space<vmem>>) attributes {dimension_semantics = [#tpu.dimension_semantics<parallel>], iteration_bounds = array<i64: 2>, scalar_prefetch = 0 : i64, scratch_operands = 0 : i64, tpu.core_type = #tpu.core_type<tc>, window_params = [{transform_indices = @transform_0, window_bounds = array<i64: 32, 128>}, {pipeline_mode = #tpu.pipeline_mode<synchronous>, transform_indices = @transform_1, window_bounds = array<i64: 656, 512>}, {transform_indices = @transform_2, window_bounds = array<i64: 32, 256>}]} {
    %c0 = arith.constant 0 : index
    %c0_0 = arith.constant 0 : index
    %0 = vector.load %arg1[%c0, %c0_0] : memref<32x128xf32, #tpu.memory_space<vmem>>, vector<32x128xf32>
    %c0_1 = arith.constant 0 : index
    %c0_2 = arith.constant 0 : index
    %1 = vector.load %arg2[%c0_1, %c0_2] : memref<656x512xf32, #tpu.memory_space<vmem>>, vector<128x512xf32>
    %c128 = arith.constant 128 : index
    %c0_3 = arith.constant 0 : index
    %2 = vector.load %arg2[%c128, %c0_3] : memref<656x512xf32, #tpu.memory_space<vmem>>, vector<1x512xf32>
    %cst = arith.constant dense<0.000000e+00> : vector<32x512xf32>
    %3 = tpu.matmul %0, %1, %cst {dimension_numbers = #tpu.dot_dimension_numbers<[1], [0], [0], [1], [0, 0, 1, 1], [], []>} : vector<32x128xf32>, vector<128x512xf32>, vector<32x512xf32> -> vector<32x512xf32>
    %4 = vector.broadcast %2 : vector<1x512xf32> to vector<32x512xf32>
    %5 = arith.addf %3, %4 : vector<32x512xf32>
    %cst_4 = arith.constant 0.000000e+00 : f32
    %6 = vector.broadcast %cst_4 : f32 to vector<32x512xf32>
    %7 = arith.maximumf %5, %6 : vector<32x512xf32>
    %c136 = arith.constant 136 : index
    %c0_5 = arith.constant 0 : index
    %8 = vector.load %arg2[%c136, %c0_5] : memref<656x512xf32, #tpu.memory_space<vmem>>, vector<512x256xf32>
    %c136_6 = arith.constant 136 : index
    %c256 = arith.constant 256 : index
    %9 = vector.load %arg2[%c136_6, %c256] : memref<656x512xf32, #tpu.memory_space<vmem>>, vector<512x256xf32>
    %c648 = arith.constant 648 : index
    %c0_7 = arith.constant 0 : index
    %10 = vector.load %arg2[%c648, %c0_7] : memref<656x512xf32, #tpu.memory_space<vmem>>, vector<1x256xf32>
    %cst_8 = arith.constant dense<0.000000e+00> : vector<32x256xf32>
    %11 = tpu.matmul %7, %8, %cst_8 {dimension_numbers = #tpu.dot_dimension_numbers<[1], [0], [0], [1], [0, 0, 1, 1], [], []>} : vector<32x512xf32>, vector<512x256xf32>, vector<32x256xf32> -> vector<32x256xf32>
    %cst_9 = arith.constant dense<0.000000e+00> : vector<32x256xf32>
    %12 = tpu.matmul %7, %9, %cst_9 {dimension_numbers = #tpu.dot_dimension_numbers<[1], [0], [0], [1], [0, 0, 1, 1], [], []>} : vector<32x512xf32>, vector<512x256xf32>, vector<32x256xf32> -> vector<32x256xf32>
    %cst_10 = arith.constant dense<0xFF800000> : vector<256xf32>
    %13 = vector.multi_reduction <maximumf>, %11, %cst_10 [0] : vector<32x256xf32> to vector<256xf32>
    %14 = vector.shape_cast %13 : vector<256xf32> to vector<1x256xf32>
    %15 = vector.broadcast %14 : vector<1x256xf32> to vector<32x256xf32>
    %16 = arith.addf %12, %15 : vector<32x256xf32>
    %17 = vector.broadcast %10 : vector<1x256xf32> to vector<32x256xf32>
    %18 = arith.addf %16, %17 : vector<32x256xf32>
    %19 = math.tanh %18 : vector<32x256xf32>
    %c0_11 = arith.constant 0 : index
    %c0_12 = arith.constant 0 : index
    %20 = vector.load %arg3[%c0_11, %c0_12] : memref<32x256xf32, #tpu.memory_space<vmem>>, vector<32x256xf32>
    tpu.vector_store %arg3[%c0_11, %c0_12], %19 {strides = array<i32>} : memref<32x256xf32, #tpu.memory_space<vmem>>, vector<32x256xf32>,
    return
  }
  func.func @transform_0(%arg0: i32) -> (i32, i32) {
    %c0_i32 = arith.constant 0 : i32
    %c0_i32_0 = arith.constant 0 : i32
    return %c0_i32, %arg0 : i32, i32
  }
  func.func @transform_1(%arg0: i32) -> (i32, i32) {
    %c0_i32 = arith.constant 0 : i32
    %c0_i32_0 = arith.constant 0 : i32
    %c0_i32_1 = arith.constant 0 : i32
    return %c0_i32, %c0_i32_0 : i32, i32
  }
  func.func @transform_2(%arg0: i32) -> (i32, i32) {
    %c0_i32 = arith.constant 0 : i32
    %c0_i32_0 = arith.constant 0 : i32
    return %c0_i32, %arg0 : i32, i32
  }
}

</mosaic_0001>

<llo_original>
// kernel: deepsets_forward.1
$region0: #{deepsets_forward.1}
  #allocation0 [shape = 'u32[]', space=smem, size = 0x4, offset = 0x4, fixed_abs, tag = 'smem constant byte address 0x4 - core index']
  #allocation1 [shape = 'u32[144,128]{1,0:T(1,128)}', space=vmem, size = 0x12000, scoped, tag = 'internal scratch']
  %s0 = inlined_call_operand.vmem [shape: f32[32,256], index: 0, kind: input, shape index: {}]
  %s1 = inlined_call_operand.hbm [shape: f32[656,512], index: 1, kind: input, shape index: {}]
  %s2 = inlined_call_operand.vmem [shape: f32[32,512], index: 2, kind: output, shape index: {}]
  %s3 = sld [smem:[#allocation0]]
  $region102: #{deepsets_forward.1} parent=0
    _
  %s5 = ssub.s32 1, %s3
  %s6 = scalar_select 0, %s5, %s3
  $region1: #{deepsets_forward.1} parent=0
    #allocation2 [shape = 'u8[32768]{0}', space=vmem, size = 0x8000, scoped, tag = 'input window, operand 0']
    #allocation3 [shape = 'u8[1343488]{0}', space=vmem, size = 0x148000, scoped, tag = 'input window, operand 1, single buffered']
    #allocation4 [shape = 's32[2]{0}', space=sflag, size = 0x8, scoped, tag = 'scoped memory for deepsets_forward.1']
    #allocation5 [shape = 'u8[65536]{0}', space=vmem, size = 0x10000, scoped, tag = 'output window, operand 0']
    %7 = vsyncpa [#allocation4], 0
    loop: start=0, step=1, limit=4
    $region2: #{deepsets_forward.1} parent=1 // loop_pre_header
      _
    $region3: #{deepsets_forward.1} parent=1 // loop_header
      %s9 = sphi 0, %s13
      %p10 = scmp.ge.s32.totalorder %s9, 4
      %s19 = sphi 0, %s21
      %s22 = sphi 0, %s19
      %s23 = sphi 0, %s22
      %s39 = sphi 0, %s23
      %s43 = sphi 0, %s43
      %s45 = sphi 0, %s43
      %s46 = sphi 0, %s45
      %s60 = sphi 0, %s46
      %s66 = sphi 0, %s68
      %s69 = sphi 0, %s66
      %s70 = sphi 0, %s69
      %s86 = sphi 0, %s70
    $region4: #{deepsets_forward.1} parent=1 // loop_header_branch
      %12 = sbr.rel (%p10) target = $region8
    $region5: #{deepsets_forward.1} parent=1 // loop_body
      %s14 = ssub.s32 %s9, 1
      %s15 = ssub.s32 %s9, 2
      %s16 = sadd.s32 %s9, 1
      %s17 = ssub.s32 %s9, %s16
      %p18 = scmp.eq.s32.totalorder %s17, 0
      %s20 = sadd.s32 %s19, 1
      %s21 = scalar_select %p18, %s19, %s20
      %p24 = pneg %p18
      %p25 = scmp.eq.s32.totalorder %s9, 1
      %p26 = por %p24, %p25
      %p27 = scmp.ne.s32.totalorder %s19, %s22
      %p28 = scmp.eq.s32.totalorder %s9, 0
      %p29 = por %p27, %p28
      %p30 = scmp.ne.s32.totalorder %s19, %s22
      %p31 = scmp.eq.s32.totalorder %s14, 1
      %p32 = por %p30, %p31
      %p33 = scmp.ne.s32.totalorder %s22, %s23
      %p34 = scmp.eq.s32.totalorder %s14, 0
      %p35 = por %p33, %p34
      %p36 = scmp.ne.s32.totalorder %s22, %s23
      %p37 = scmp.eq.s32.totalorder %s15, 1
      %p38 = por %p36, %p37
      %p40 = scmp.ne.s32.totalorder %s23, %s39
      %p41 = scmp.eq.s32.totalorder %s15, 0
      %p42 = por %p40, %p41
      %s44 = sadd.s32 %s43, 1
      %p47 = scmp.eq.s32.totalorder %s9, 1
      %p48 = scmp.ne.s32.totalorder %s43, %s45
      %p49 = scmp.eq.s32.totalorder %s9, 0
      %p50 = por %p48, %p49
      %p51 = scmp.ne.s32.totalorder %s43, %s45
      %p52 = scmp.eq.s32.totalorder %s14, 1
      %p53 = por %p51, %p52
      %p54 = scmp.ne.s32.totalorder %s45, %s46
      %p55 = scmp.eq.s32.totalorder %s14, 0
      %p56 = por %p54, %p55
      %p57 = scmp.ne.s32.totalorder %s45, %s46
      %p58 = scmp.eq.s32.totalorder %s15, 1
      %p59 = por %p57, %p58
      %p61 = scmp.ne.s32.totalorder %s46, %s60
      %p62 = scmp.eq.s32.totalorder %s15, 0
      %p63 = por %p61, %p62
      %s64 = ssub.s32 %s9, %s16
      %p65 = scmp.eq.s32.totalorder %s64, 0
      %s67 = sadd.s32 %s66, 1
      %s68 = scalar_select %p65, %s66, %s67
      %p71 = pneg %p65
      %p72 = scmp.eq.s32.totalorder %s9, 1
      %p73 = por %p71, %p72
      %p74 = scmp.ne.s32.totalorder %s66, %s69
      %p75 = scmp.eq.s32.totalorder %s9, 0
      %p76 = por %p74, %p75
      %p77 = scmp.ne.s32.totalorder %s66, %s69
      %p78 = scmp.eq.s32.totalorder %s14, 1
      %p79 = por %p77, %p78
      %p80 = scmp.ne.s32.totalorder %s69, %s70
      %p81 = scmp.eq.s32.totalorder %s14, 0
      %p82 = por %p80, %p81
      %p83 = scmp.ne.s32.totalorder %s69, %s70
      %p84 = scmp.eq.s32.totalorder %s15, 1
      %p85 = por %p83, %p84
      %p87 = scmp.ne.s32.totalorder %s70, %s86
      %p88 = scmp.eq.s32.totalorder %s15, 0
      %p89 = por %p87, %p88
      %p90 = scmp.le.s32.totalorder 1, %s9
      %p91 = scmp.lt.s32.totalorder %s9, 3
      %p92 = pnand %p90, %p91
      %p93 = pneg %p92
      // Predicated region
      $region9: #{deepsets_forward.1} parent=5 // pred_check
        _
      $region10: #{deepsets_forward.1} parent=5 // pred_check_branch
        %95 = sbr.rel (%p92) target = $region12
      $region11: #{deepsets_forward.1} parent=5 // pred_region
        %s96 = ssub.s32 %s9, 1
        // Predicated region
        $region13: #{deepsets_forward.1} parent=11 // pred_check
          %p97 = pneg %p56
        $region14: #{deepsets_forward.1} parent=11 // pred_check_branch
          %99 = sbr.rel (%p97) target = $region16
        $region15: #{deepsets_forward.1} parent=11 // pred_region
          %s101 = ssub.s32 41984, 41984
          %102 = vsyncadd [#allocation4], %s101
          %s103 = sshll.u32 [#allocation3], 4
          %s104 = int_to_ptr.vmem [resolvable:$true] %s103
          %109 = dma.hbm_to_vmem [thread:$0]  %s1, 41984, %s104, [#allocation4], 512, 512, 32
        $region16: #{deepsets_forward.1} parent=11 // pred_fallthru
          _
      $region12: #{deepsets_forward.1} parent=5 // pred_fallthru
        _
      %p110 = scmp.lt.s32.totalorder %s9, 2
      // Predicated region
      $region17: #{deepsets_forward.1} parent=5 // pred_check
        %p111 = pneg %p110
      $region18: #{deepsets_forward.1} parent=5 // pred_check_branch
        %113 = sbr.rel (%p111) target = $region20
      $region19: #{deepsets_forward.1} parent=5 // pred_region
        // Predicated region
        $region21: #{deepsets_forward.1} parent=19 // pred_check
          %p114 = pneg %p29
        $region22: #{deepsets_forward.1} parent=19 // pred_check_branch
          %116 = sbr.rel (%p114) target = $region24
        $region23: #{deepsets_forward.1} parent=19 // pred_region
          %s117 = sand.u32 %s19, 1
          %s118 = sand.u32 %s19, 1
          %s119 = smul.addr %s118, 32
          %s120 = scalar_lea.vmem [#allocation2], %s119
          %s121 = smul.addr %s9, 8
          %s122 = scalar_lea.vmem %s0, %s121
          // Predicated region
          $region25: #{deepsets_forward.1} parent=23 // pred_check
            _
          $region26: #{deepsets_forward.1} parent=23 // pred_check_branch
            %124 = sbr.rel (0) target = $region28
          $region27: #{deepsets_forward.1} parent=23 // pred_region
            // Predicated region
            $region29: #{deepsets_forward.1} parent=27 // pred_check
              _
            $region30: #{deepsets_forward.1} parent=27 // pred_check_branch
              %126 = sbr.rel (0) target = $region32
            $region31: #{deepsets_forward.1} parent=27 // pred_region
              // Predicated region
              $region44: #{deepsets_forward.1} parent=31 // pred_check
                _
              $region45: #{deepsets_forward.1} parent=31 // pred_check_branch
                %147 = sbr.rel (0) target = $region47
              $region46: #{deepsets_forward.1} parent=31 // pred_region
                loop: start=0, step=1, limit=1
                $region48: #{deepsets_forward.1} parent=46 // loop_pre_header
                  _
                $region49: #{deepsets_forward.1} parent=46 // loop_header
                  %s149 = sphi 0, %s153
                  %p150 = scmp.ge.s32.totalorder %s149, 1
                  %s154 = sphi %s122, %s122
                  %s155 = sphi %s120, %s120
                $region50: #{deepsets_forward.1} parent=46 // loop_header_branch
                  %152 = sbr.rel (%p150) target = $region54
                $region51: #{deepsets_forward.1} parent=46 // loop_body
                  %v156 = vld [vmem:[%s154] sm:$0xff]
                  %157 = vst [vmem:[%s155] sm:$0xff] %v156
                  %v158 = vld [vmem:[%s154 + $0x10] sm:$0xff]
                  %159 = vst [vmem:[%s155 + $0x8] sm:$0xff] %v158
                  %v160 = vld [vmem:[%s154 + $0x20] sm:$0xff]
                  %161 = vst [vmem:[%s155 + $0x10] sm:$0xff] %v160
                  %v162 = vld [vmem:[%s154 + $0x30] sm:$0xff]
                  %163 = vst [vmem:[%s155 + $0x18] sm:$0xff] %v162
                $region52: #{deepsets_forward.1} parent=46 // loop_footer
                  %s153 = sadd.s32 1, %s149
                $region53: #{deepsets_forward.1} parent=46 // loop_footer_branch
                  %148 = sbr.rel target = $region49
                $region54: #{deepsets_forward.1} parent=46 // loop_exit
                  _
              $region47: #{deepsets_forward.1} parent=31 // pred_fallthru
                _
              // Predicated region
              $region55: #{deepsets_forward.1} parent=31 // pred_check
                _
              $region56: #{deepsets_forward.1} parent=31 // pred_check_branch
                %165 = sbr.rel target = $region58
              $region57: #{deepsets_forward.1} parent=31 // pred_region
                _
              $region58: #{deepsets_forward.1} parent=31 // pred_fallthru
                _
            $region32: #{deepsets_forward.1} parent=27 // pred_fallthru
              _
            // Predicated region
            $region33: #{deepsets_forward.1} parent=27 // pred_check
              _
            $region34: #{deepsets_forward.1} parent=27 // pred_check_branch
              %128 = sbr.rel target = $region36
            $region35: #{deepsets_forward.1} parent=27 // pred_region
              loop: start=0, step=1, limit=1
              $region37: #{deepsets_forward.1} parent=35 // loop_pre_header
                _
              $region38: #{deepsets_forward.1} parent=35 // loop_header
                %s131 = sphi 0, %s135
                %p132 = scmp.ge.s32.totalorder %s131, 1
                %s136 = sphi %s122, %s122
                %s137 = sphi %s120, %s120
              $region39: #{deepsets_forward.1} parent=35 // loop_header_branch
                %134 = sbr.rel (%p132) target = $region43
              $region40: #{deepsets_forward.1} parent=35 // loop_body
                %v138 = vld [vmem:[%s136] sm:$0xff]
                %139 = vst [vmem:[%s137] sm:$0xff] %v138
                %v140 = vld [vmem:[%s136 + $0x10] sm:$0xff]
                %141 = vst [vmem:[%s137 + $0x8] sm:$0xff] %v140
                %v142 = vld [vmem:[%s136 + $0x20] sm:$0xff]
                %143 = vst [vmem:[%s137 + $0x10] sm:$0xff] %v142
                %v144 = vld [vmem:[%s136 + $0x30] sm:$0xff]
                %145 = vst [vmem:[%s137 + $0x18] sm:$0xff] %v144
              $region41: #{deepsets_forward.1} parent=35 // loop_footer
                %s135 = sadd.s32 1, %s131
              $region42: #{deepsets_forward.1} parent=35 // loop_footer_branch
                %130 = sbr.rel target = $region38
              $region43: #{deepsets_forward.1} parent=35 // loop_exit
                _
            $region36: #{deepsets_forward.1} parent=27 // pred_fallthru
              _
          $region28: #{deepsets_forward.1} parent=23 // pred_fallthru
            _
          %166 = vnop
        $region24: #{deepsets_forward.1} parent=19 // pred_fallthru
          _
      $region20: #{deepsets_forward.1} parent=5 // pred_fallthru
        _
      %p167 = scmp.le.s32.totalorder 1, %s9
      %p168 = scmp.lt.s32.totalorder %s9, 3
      %p169 = pnand %p167, %p168
      %p170 = pneg %p169
      // Predicated region
      $region59: #{deepsets_forward.1} parent=5 // pred_check
        _
      $region60: #{deepsets_forward.1} parent=5 // pred_check_branch
        %172 = sbr.rel (%p169) target = $region62
      $region61: #{deepsets_forward.1} parent=5 // pred_region
        %s173 = ssub.s32 %s9, 1
        %s174 = sand.u32 %s22, 1
        %s175 = sand.u32 %s22, 1
        %s176 = smul.addr %s175, 32
        %s177 = scalar_lea.vmem [#allocation2], %s176
        // Predicated region
        $region63: #{deepsets_forward.1} parent=61 // pred_check
          %p178 = pneg %p35
        $region64: #{deepsets_forward.1} parent=61 // pred_check_branch
          %180 = sbr.rel (%p178) target = $region66
        $region65: #{deepsets_forward.1} parent=61 // pred_region
          _
        $region66: #{deepsets_forward.1} parent=61 // pred_fallthru
          _
        // Predicated region
        $region67: #{deepsets_forward.1} parent=61 // pred_check
          %p181 = pneg %p56
        $region68: #{deepsets_forward.1} parent=61 // pred_check_branch
          %183 = sbr.rel (%p181) target = $region70
        $region69: #{deepsets_forward.1} parent=61 // pred_region
          %184 = dma.done [#allocation4], 41984
        $region70: #{deepsets_forward.1} parent=61 // pred_fallthru
          _
        %s185 = sand.u32 %s22, 1
        %s186 = sand.u32 %s22, 1
        %s187 = smul.addr %s186, 32
        %s188 = scalar_lea.vmem [#allocation2], %s187
        %p189 = pneg %p35
        %p190 = pneg %p32
        %p191 = pneg %p56
        %p192 = pneg %p53
        %p193 = pneg %p82
        %p194 = pneg %p79
        %s195 = sand.u32 %s69, 1
        %s196 = sand.u32 %s69, 1
        %s197 = smul.addr %s196, 64
        %s198 = scalar_lea.vmem [#allocation5], %s197
        %s199 = smul.u32 2, %s14
        %v200 = vld [vmem:[%s177] sm:$0xff]
        %v201 = vld [vmem:[%s177 + $0x8] sm:$0xff]
        %v202 = vld [vmem:[%s177 + $0x10] sm:$0xff]
        %v203 = vld [vmem:[%s177 + $0x18] sm:$0xff]
        %v204 = vld [vmem:[#allocation3] sm:$0xff]
        %v205 = vld [vmem:[#allocation3 + $0x8] sm:$0xff]
        %v206 = vld [vmem:[#allocation3 + $0x10] sm:$0xff]
        %v207 = vld [vmem:[#allocation3 + $0x18] sm:$0xff]
        %v208 = vld [vmem:[#allocation3 + $0x20] sm:$0xff]
        %v209 = vld [vmem:[#allocation3 + $0x28] sm:$0xff]
        %v210 = vld [vmem:[#allocation3 + $0x30] sm:$0xff]
        %v211 = vld [vmem:[#allocation3 + $0x38] sm:$0xff]
        %v212 = vld [vmem:[#allocation3 + $0x40] sm:$0xff]
        %v213 = vld [vmem:[#allocation3 + $0x48] sm:$0xff]
        %v214 = vld [vmem:[#allocation3 + $0x50] sm:$0xff]
        %v215 = vld [vmem:[#allocation3 + $0x58] sm:$0xff]
        %v216 = vld [vmem:[#allocation3 + $0x60] sm:$0xff]
        %v217 = vld [vmem:[#allocation3 + $0x68] sm:$0xff]
        %v218 = vld [vmem:[#allocation3 + $0x70] sm:$0xff]
        %v219 = vld [vmem:[#allocation3 + $0x78] sm:$0xff]
        %v220 = vld [vmem:[#allocation3 + $0x80] sm:$0xff]
        %v221 = vld [vmem:[#allocation3 + $0x88] sm:$0xff]
        %v222 = vld [vmem:[#allocation3 + $0x90] sm:$0xff]
        %v223 = vld [vmem:[#allocation3 + $0x98] sm:$0xff]
        %v224 = vld [vmem:[#allocation3 + $0xa0] sm:$0xff]
        %v225 = vld [vmem:[#allocation3 + $0xa8] sm:$0xff]
        %v226 = vld [vmem:[#allocation3 + $0xb0] sm:$0xff]
        %v227 = vld [vmem:[#allocation3 + $0xb8] sm:$0xff]
        %v228 = vld [vmem:[#allocation3 + $0xc0] sm:$0xff]
        %v229 = vld [vmem:[#allocation3 + $0xc8] sm:$0xff]
        %v230 = vld [vmem:[#allocation3 + $0xd0] sm:$0xff]
        %v231 = vld [vmem:[#allocation3 + $0xd8] sm:$0xff]
        %v232 = vld [vmem:[#allocation3 + $0xe0] sm:$0xff]
        %v233 = vld [vmem:[#allocation3 + $0xe8] sm:$0xff]
        %v234 = vld [vmem:[#allocation3 + $0xf0] sm:$0xff]
        %v235 = vld [vmem:[#allocation3 + $0xf8] sm:$0xff]
        %v236 = vld [vmem:[#allocation3 + $0x100] sm:$0xff]
        %v237 = vld [vmem:[#allocation3 + $0x108] sm:$0xff]
        %v238 = vld [vmem:[#allocation3 + $0x110] sm:$0xff]
        %v239 = vld [vmem:[#allocation3 + $0x118] sm:$0xff]
        %v240 = vld [vmem:[#allocation3 + $0x120] sm:$0xff]
        %v241 = vld [vmem:[#allocation3 + $0x128] sm:$0xff]
        %v242 = vld [vmem:[#allocation3 + $0x130] sm:$0xff]
        %v243 = vld [vmem:[#allocation3 + $0x138] sm:$0xff]
        %v244 = vld [vmem:[#allocation3 + $0x140] sm:$0xff]
        %v245 = vld [vmem:[#allocation3 + $0x148] sm:$0xff]
        %v246 = vld [vmem:[#allocation3 + $0x150] sm:$0xff]
        %v247 = vld [vmem:[#allocation3 + $0x158] sm:$0xff]
        %v248 = vld [vmem:[#allocation3 + $0x160] sm:$0xff]
        %v249 = vld [vmem:[#allocation3 + $0x168] sm:$0xff]
        %v250 = vld [vmem:[#allocation3 + $0x170] sm:$0xff]
        %v251 = vld [vmem:[#allocation3 + $0x178] sm:$0xff]
        %v252 = vld [vmem:[#allocation3 + $0x180] sm:$0xff]
        %v253 = vld [vmem:[#allocation3 + $0x188] sm:$0xff]
        %v254 = vld [vmem:[#allocation3 + $0x190] sm:$0xff]
        %v255 = vld [vmem:[#allocation3 + $0x198] sm:$0xff]
        %v256 = vld [vmem:[#allocation3 + $0x1a0] sm:$0xff]
        %v257 = vld [vmem:[#allocation3 + $0x1a8] sm:$0xff]
        %v258 = vld [vmem:[#allocation3 + $0x1b0] sm:$0xff]
        %v259 = vld [vmem:[#allocation3 + $0x1b8] sm:$0xff]
        %v260 = vld [vmem:[#allocation3 + $0x1c0] sm:$0xff]
        %v261 = vld [vmem:[#allocation3 + $0x1c8] sm:$0xff]
        %v262 = vld [vmem:[#allocation3 + $0x1d0] sm:$0xff]
        %v263 = vld [vmem:[#allocation3 + $0x1d8] sm:$0xff]
        %v264 = vld [vmem:[#allocation3 + $0x1e0] sm:$0xff]
        %v265 = vld [vmem:[#allocation3 + $0x1e8] sm:$0xff]
        %v266 = vld [vmem:[#allocation3 + $0x1f0] sm:$0xff]
        %v267 = vld [vmem:[#allocation3 + $0x1f8] sm:$0xff]
        %s268 = scalar_lea.vmem [#allocation3], 512
        %v269 = vld [vmem:[%s268] ss:$8 sm:$0xf]
        %v271 = vlaneseq
        %v272 = vshrl.u32 %v271, 7
        %v273 = vsub.s32 0, %v272
        %v274 = vrot.slane %v269, %v273
        %v275 = vlaneseq
        %v276 = vshrl.u32 %v275, 7
        %v277 = vsub.s32 1, %v276
        %v278 = vrot.slane %v269, %v277
        %v279 = vlaneseq
        %v280 = vshrl.u32 %v279, 7
        %v281 = vsub.s32 2, %v280
        %v282 = vrot.slane %v269, %v281
        %v283 = vlaneseq
        %v284 = vshrl.u32 %v283, 7
        %v285 = vsub.s32 3, %v284
        %v286 = vrot.slane %v269, %v285
        %291 = vmatprep.subr.mxu0 %v205
        %292 = vmatpush1.msra.mxu0 %v204
        %293 = vmatprep.subr.mxu0 %v209
        %294 = vmatpush1.msra.mxu0 %v208
        %295 = vmatprep.subr.mxu0 %v213
        %296 = vmatpush1.msra.mxu0 %v212
        %297 = vmatprep.subr.mxu0 %v217
        %298 = vmatpush1.msra.mxu0 %v216
        %299 = vmatprep.subr.mxu0 %v221
        %300 = vmatpush1.msra.mxu0 %v220
        %301 = vmatprep.subr.mxu0 %v225
        %302 = vmatpush1.msra.mxu0 %v224
        %303 = vmatprep.subr.mxu0 %v229
        %304 = vmatpush1.msra.mxu0 %v228
        %305 = vmatprep.subr.mxu0 %v233
        %306 = vmatpush1.msra.mxu0 %v232
        %307 = vmatprep.subr.mxu0 %v237
        %308 = vmatpush1.msra.mxu0 %v236
        %309 = vmatprep.subr.mxu0 %v241
        %310 = vmatpush1.msra.mxu0 %v240
        %311 = vmatprep.subr.mxu0 %v245
        %312 = vmatpush1.msra.mxu0 %v244
        %313 = vmatprep.subr.mxu0 %v249
        %314 = vmatpush1.msra.mxu0 %v248
        %315 = vmatprep.subr.mxu0 %v253
        %316 = vmatpush1.msra.mxu0 %v252
        %317 = vmatprep.subr.mxu0 %v257
        %318 = vmatpush1.msra.mxu0 %v256
        %319 = vmatprep.subr.mxu0 %v261
        %320 = vmatpush1.msra.mxu0 %v260
        %321 = vmatprep.subr.mxu0 %v265
        %322 = vmatpush1.msra.mxu0 %v264
        %323 = vmatprep.subr.mxu0 0.0
        %324 = vmatpush1.msra.mxu0 0.0
        %325 = vmatprep.subr.mxu0 0.0
        %326 = vmatpush1.msra.mxu0 0.0
        %327 = vmatprep.subr.mxu0 0.0
        %328 = vmatpush1.msra.mxu0 0.0
        %329 = vmatprep.subr.mxu0 0.0
        %330 = vmatpush1.msra.mxu0 0.0
        %331 = vmatprep.subr.mxu0 0.0
        %332 = vmatpush1.msra.mxu0 0.0
        %333 = vmatprep.subr.mxu0 0.0
        %334 = vmatpush1.msra.mxu0 0.0
        %335 = vmatprep.subr.mxu0 0.0
        %336 = vmatpush1.msra.mxu0 0.0
        %337 = vmatprep.subr.mxu0 0.0
        %338 = vmatpush1.msra.mxu0 0.0
        %339 = vmatprep.subr.mxu0 0.0
        %340 = vmatpush1.msra.mxu0 0.0
        %341 = vmatprep.subr.mxu0 0.0
        %342 = vmatpush1.msra.mxu0 0.0
        %343 = vmatprep.subr.mxu0 0.0
        %344 = vmatpush1.msra.mxu0 0.0
        %345 = vmatprep.subr.mxu0 0.0
        %346 = vmatpush1.msra.mxu0 0.0
        %347 = vmatprep.subr.mxu0 0.0
        %348 = vmatpush1.msra.mxu0 0.0
        %349 = vmatprep.subr.mxu0 0.0
        %350 = vmatpush1.msra.mxu0 0.0
        %351 = vmatprep.subr.mxu0 0.0
        %352 = vmatpush1.msra.mxu0 0.0
        %353 = vmatprep.subr.mxu0 0.0
        %354 = vmatpush1.msra.mxu0 0.0
        %355 = vmatprep.mubr.f32.mxu0 0.0
        %356 = vmatmul.mubr.f32.gmra.mrb[0].mxu0 %v200
        %v357 = vpop.f32.mrb[0].mxu0
        %v358 = vadd.f32 %v274, %v357
        %v359 = vpop.f32.mrb[0].mxu0
        %v360 = vadd.f32 %v278, %v359
        %361 = vmatprep.mubr.f32.mxu0 0.0
        %362 = vmatmul.mubr.f32.gmra.mrb[0].mxu0 %v201
        %v363 = vpop.f32.mrb[0].mxu0
        %v364 = vadd.f32 %v274, %v363
        %v365 = vpop.f32.mrb[0].mxu0
        %v366 = vadd.f32 %v278, %v365
        %367 = vmatprep.mubr.f32.mxu0 0.0
        %368 = vmatmul.mubr.f32.gmra.mrb[0].mxu0 %v202
        %v369 = vpop.f32.mrb[0].mxu0
        %v370 = vadd.f32 %v274, %v369
        %v371 = vpop.f32.mrb[0].mxu0
        %v372 = vadd.f32 %v278, %v371
        %373 = vmatprep.mubr.f32.mxu0 0.0
        %374 = vmatmul.mubr.f32.gmra.mrb[0].mxu0 %v203
        %v375 = vpop.f32.mrb[0].mxu0
        %v376 = vadd.f32 %v274, %v375
        %v377 = vpop.f32.mrb[0].mxu0
        %v378 = vadd.f32 %v278, %v377
        %379 = vdwg.mxu0
        %380 = vmatprep.subr.mxu0 %v207
        %381 = vmatpush1.msra.mxu0 %v206
        %382 = vmatprep.subr.mxu0 %v211
        %383 = vmatpush1.msra.mxu0 %v210
        %384 = vmatprep.subr.mxu0 %v215
        %385 = vmatpush1.msra.mxu0 %v214
        %386 = vmatprep.subr.mxu0 %v219
        %387 = vmatpush1.msra.mxu0 %v218
        %388 = vmatprep.subr.mxu0 %v223
        %389 = vmatpush1.msra.mxu0 %v222
        %390 = vmatprep.subr.mxu0 %v227
        %391 = vmatpush1.msra.mxu0 %v226
        %392 = vmatprep.subr.mxu0 %v231
        %393 = vmatpush1.msra.mxu0 %v230
        %394 = vmatprep.subr.mxu0 %v235
        %395 = vmatpush1.msra.mxu0 %v234
        %396 = vmatprep.subr.mxu0 %v239
        %397 = vmatpush1.msra.mxu0 %v238
        %398 = vmatprep.subr.mxu0 %v243
        %399 = vmatpush1.msra.mxu0 %v242
        %400 = vmatprep.subr.mxu0 %v247
        %401 = vmatpush1.msra.mxu0 %v246
        %402 = vmatprep.subr.mxu0 %v251
        %403 = vmatpush1.msra.mxu0 %v250
        %404 = vmatprep.subr.mxu0 %v255
        %405 = vmatpush1.msra.mxu0 %v254
        %406 = vmatprep.subr.mxu0 %v259
        %407 = vmatpush1.msra.mxu0 %v258
        %408 = vmatprep.subr.mxu0 %v263
        %409 = vmatpush1.msra.mxu0 %v262
        %410 = vmatprep.subr.mxu0 %v267
        %411 = vmatpush1.msra.mxu0 %v266
        %412 = vmatprep.subr.mxu0 0.0
        %413 = vmatpush1.msra.mxu0 0.0
        %414 = vmatprep.subr.mxu0 0.0
        %415 = vmatpush1.msra.mxu0 0.0
        %416 = vmatprep.subr.mxu0 0.0
        %417 = vmatpush1.msra.mxu0 0.0
        %418 = vmatprep.subr.mxu0 0.0
        %419 = vmatpush1.msra.mxu0 0.0
        %420 = vmatprep.subr.mxu0 0.0
        %421 = vmatpush1.msra.mxu0 0.0
        %422 = vmatprep.subr.mxu0 0.0
        %423 = vmatpush1.msra.mxu0 0.0
        %424 = vmatprep.subr.mxu0 0.0
        %425 = vmatpush1.msra.mxu0 0.0
        %426 = vmatprep.subr.mxu0 0.0
        %427 = vmatpush1.msra.mxu0 0.0
        %428 = vmatprep.subr.mxu0 0.0
        %429 = vmatpush1.msra.mxu0 0.0
        %430 = vmatprep.subr.mxu0 0.0
        %431 = vmatpush1.msra.mxu0 0.0
        %432 = vmatprep.subr.mxu0 0.0
        %433 = vmatpush1.msra.mxu0 0.0
        %434 = vmatprep.subr.mxu0 0.0
        %435 = vmatpush1.msra.mxu0 0.0
        %436 = vmatprep.subr.mxu0 0.0
        %437 = vmatpush1.msra.mxu0 0.0
        %438 = vmatprep.subr.mxu0 0.0
        %439 = vmatpush1.msra.mxu0 0.0
        %440 = vmatprep.subr.mxu0 0.0
        %441 = vmatpush1.msra.mxu0 0.0
        %442 = vmatprep.subr.mxu0 0.0
        %443 = vmatpush1.msra.mxu0 0.0
        %444 = vmatprep.mubr.f32.mxu0 0.0
        %445 = vmatmul.mubr.f32.gmra.mrb[0].mxu0 %v200
        %v446 = vpop.f32.mrb[0].mxu0
        %v447 = vadd.f32 %v282, %v446
        %v448 = vpop.f32.mrb[0].mxu0
        %v449 = vadd.f32 %v286, %v448
        %450 = vmatprep.mubr.f32.mxu0 0.0
        %451 = vmatmul.mubr.f32.gmra.mrb[0].mxu0 %v201
        %v452 = vpop.f32.mrb[0].mxu0
        %v453 = vadd.f32 %v282, %v452
        %v454 = vpop.f32.mrb[0].mxu0
        %v455 = vadd.f32 %v286, %v454
        %456 = vmatprep.mubr.f32.mxu0 0.0
        %457 = vmatmul.mubr.f32.gmra.mrb[0].mxu0 %v202
        %v458 = vpop.f32.mrb[0].mxu0
        %v459 = vadd.f32 %v282, %v458
        %v460 = vpop.f32.mrb[0].mxu0
        %v461 = vadd.f32 %v286, %v460
        %462 = vmatprep.mubr.f32.mxu0 0.0
        %463 = vmatmul.mubr.f32.gmra.mrb[0].mxu0 %v203
        %v464 = vpop.f32.mrb[0].mxu0
        %v465 = vadd.f32 %v282, %v464
        %v466 = vpop.f32.mrb[0].mxu0
        %v467 = vadd.f32 %v286, %v466
        %468 = vdwg.mxu0
        %v469 = vmax.f32 %v358, 0.0
        %v470 = vmax.f32 %v360, 0.0
        %v471 = vmax.f32 %v447, 0.0
        %v472 = vmax.f32 %v449, 0.0
        %v473 = vmax.f32 %v364, 0.0
        %v474 = vmax.f32 %v366, 0.0
        %v475 = vmax.f32 %v453, 0.0
        %v476 = vmax.f32 %v455, 0.0
        %v477 = vmax.f32 %v370, 0.0
        %v478 = vmax.f32 %v372, 0.0
        %v479 = vmax.f32 %v459, 0.0
        %v480 = vmax.f32 %v461, 0.0
        %v481 = vmax.f32 %v376, 0.0
        %v482 = vmax.f32 %v378, 0.0
        %v483 = vmax.f32 %v465, 0.0
        %v484 = vmax.f32 %v467, 0.0
        %v485 = vld [vmem:[#allocation3 + $0x220] sm:$0xff]
        %v486 = vld [vmem:[#allocation3 + $0x228] sm:$0xff]
        %v487 = vld [vmem:[#allocation3 + $0x240] sm:$0xff]
        %v488 = vld [vmem:[#allocation3 + $0x248] sm:$0xff]
        %v489 = vld [vmem:[#allocation3 + $0x260] sm:$0xff]
        %v490 = vld [vmem:[#allocation3 + $0x268] sm:$0xff]
        %v491 = vld [vmem:[#allocation3 + $0x280] sm:$0xff]
        %v492 = vld [vmem:[#allocation3 + $0x288] sm:$0xff]
        %v493 = vld [vmem:[#allocation3 + $0x2a0] sm:$0xff]
        %v494 = vld [vmem:[#allocation3 + $0x2a8] sm:$0xff]
        %v495 = vld [vmem:[#allocation3 + $0x2c0] sm:$0xff]
        %v496 = vld [vmem:[#allocation3 + $0x2c8] sm:$0xff]
        %v497 = vld [vmem:[#allocation3 + $0x2e0] sm:$0xff]
        %v498 = vld [vmem:[#allocation3 + $0x2e8] sm:$0xff]
        %v499 = vld [vmem:[#allocation3 + $0x300] sm:$0xff]
        %v500 = vld [vmem:[#allocation3 + $0x308] sm:$0xff]
        %v501 = vld [vmem:[#allocation3 + $0x320] sm:$0xff]
        %v502 = vld [vmem:[#allocation3 + $0x328] sm:$0xff]
        %v503 = vld [vmem:[#allocation3 + $0x340] sm:$0xff]
        %v504 = vld [vmem:[#allocation3 + $0x348] sm:$0xff]
        %v505 = vld [vmem:[#allocation3 + $0x360] sm:$0xff]
        %v506 = vld [vmem:[#allocation3 + $0x368] sm:$0xff]
        %v507 = vld [vmem:[#allocation3 + $0x380] sm:$0xff]
        %v508 = vld [vmem:[#allocation3 + $0x388] sm:$0xff]
        %v509 = vld [vmem:[#allocation3 + $0x3a0] sm:$0xff]
        %v510 = vld [vmem:[#allocation3 + $0x3a8] sm:$0xff]
        %v511 = vld [vmem:[#allocation3 + $0x3c0] sm:$0xff]
        %v512 = vld [vmem:[#allocation3 + $0x3c8] sm:$0xff]
        %v513 = vld [vmem:[#allocation3 + $0x3e0] sm:$0xff]
        %v514 = vld [vmem:[#allocation3 + $0x3e8] sm:$0xff]
        %v515 = vld [vmem:[#allocation3 + $0x400] sm:$0xff]
        %v516 = vld [vmem:[#allocation3 + $0x408] sm:$0xff]
        %v517 = vld [vmem:[#allocation3 + $0x420] sm:$0xff]
        %v518 = vld [vmem:[#allocation3 + $0x428] sm:$0xff]
        %v519 = vld [vmem:[#allocation3 + $0x440] sm:$0xff]
        %v520 = vld [vmem:[#allocation3 + $0x448] sm:$0xff]
        %v521 = vld [vmem:[#allocation3 + $0x460] sm:$0xff]
        %v522 = vld [vmem:[#allocation3 + $0x468] sm:$0xff]
        %v523 = vld [vmem:[#allocation3 + $0x480] sm:$0xff]
        %v524 = vld [vmem:[#allocation3 + $0x488] sm:$0xff]
        %v525 = vld [vmem:[#allocation3 + $0x4a0] sm:$0xff]
        %v526 = vld [vmem:[#allocation3 + $0x4a8] sm:$0xff]
        %v527 = vld [vmem:[#allocation3 + $0x4c0] sm:$0xff]
        %v528 = vld [vmem:[#allocation3 + $0x4c8] sm:$0xff]
        %v529 = vld [vmem:[#allocation3 + $0x4e0] sm:$0xff]
        %v530 = vld [vmem:[#allocation3 + $0x4e8] sm:$0xff]
        %v531 = vld [vmem:[#allocation3 + $0x500] sm:$0xff]
        %v532 = vld [vmem:[#allocation3 + $0x508] sm:$0xff]
        %v533 = vld [vmem:[#allocation3 + $0x520] sm:$0xff]
        %v534 = vld [vmem:[#allocation3 + $0x528] sm:$0xff]
        %v535 = vld [vmem:[#allocation3 + $0x540] sm:$0xff]
        %v536 = vld [vmem:[#allocation3 + $0x548] sm:$0xff]
        %v537 = vld [vmem:[#allocation3 + $0x560] sm:$0xff]
        %v538 = vld [vmem:[#allocation3 + $0x568] sm:$0xff]
        %v539 = vld [vmem:[#allocation3 + $0x580] sm:$0xff]
        %v540 = vld [vmem:[#allocation3 + $0x588] sm:$0xff]
        %v541 = vld [vmem:[#allocation3 + $0x5a0] sm:$0xff]
        %v542 = vld [vmem:[#allocation3 + $0x5a8] sm:$0xff]
        %v543 = vld [vmem:[#allocation3 + $0x5c0] sm:$0xff]
        %v544 = vld [vmem:[#allocation3 + $0x5c8] sm:$0xff]
        %v545 = vld [vmem:[#allocation3 + $0x5e0] sm:$0xff]
        %v546 = vld [vmem:[#allocation3 + $0x5e8] sm:$0xff]
        %v547 = vld [vmem:[#allocation3 + $0x600] sm:$0xff]
        %v548 = vld [vmem:[#allocation3 + $0x608] sm:$0xff]
        %v549 = vld [vmem:[#allocation3 + $0x620] sm:$0xff]
        %v550 = vld [vmem:[#allocation3 + $0x628] sm:$0xff]
        %v551 = vld [vmem:[#allocation3 + $0x640] sm:$0xff]
        %v552 = vld [vmem:[#allocation3 + $0x648] sm:$0xff]
        %v553 = vld [vmem:[#allocation3 + $0x660] sm:$0xff]
        %v554 = vld [vmem:[#allocation3 + $0x668] sm:$0xff]
        %v555 = vld [vmem:[#allocation3 + $0x680] sm:$0xff]
        %v556 = vld [vmem:[#allocation3 + $0x688] sm:$0xff]
        %v557 = vld [vmem:[#allocation3 + $0x6a0] sm:$0xff]
        %v558 = vld [vmem:[#allocation3 + $0x6a8] sm:$0xff]
        %v559 = vld [vmem:[#allocation3 + $0x6c0] sm:$0xff]
        %v560 = vld [vmem:[#allocation3 + $0x6c8] sm:$0xff]
        %v561 = vld [vmem:[#allocation3 + $0x6e0] sm:$0xff]
        %v562 = vld [vmem:[#allocation3 + $0x6e8] sm:$0xff]
        %v563 = vld [vmem:[#allocation3 + $0x700] sm:$0xff]
        %v564 = vld [vmem:[#allocation3 + $0x708] sm:$0xff]
        %v565 = vld [vmem:[#allocation3 + $0x720] sm:$0xff]
        %v566 = vld [vmem:[#allocation3 + $0x728] sm:$0xff]
        %v567 = vld [vmem:[#allocation3 + $0x740] sm:$0xff]
        %v568 = vld [vmem:[#allocation3 + $0x748] sm:$0xff]
        %v569 = vld [vmem:[#allocation3 + $0x760] sm:$0xff]
        %v570 = vld [vmem:[#allocation3 + $0x768] sm:$0xff]
        %v571 = vld [vmem:[#allocation3 + $0x780] sm:$0xff]
        %v572 = vld [vmem:[#allocation3 + $0x788] sm:$0xff]
        %v573 = vld [vmem:[#allocation3 + $0x7a0] sm:$0xff]
        %v574 = vld [vmem:[#allocation3 + $0x7a8] sm:$0xff]
        %v575 = vld [vmem:[#allocation3 + $0x7c0] sm:$0xff]
        %v576 = vld [vmem:[#allocation3 + $0x7c8] sm:$0xff]
        %v577 = vld [vmem:[#allocation3 + $0x7e0] sm:$0xff]
        %v578 = vld [vmem:[#allocation3 + $0x7e8] sm:$0xff]
        %v579 = vld [vmem:[#allocation3 + $0x800] sm:$0xff]
        %v580 = vld [vmem:[#allocation3 + $0x808] sm:$0xff]
        %v581 = vld [vmem:[#allocation3 + $0x820] sm:$0xff]
        %v582 = vld [vmem:[#allocation3 + $0x828] sm:$0xff]
        %v583 = vld [vmem:[#allocation3 + $0x840] sm:$0xff]
        %v584 = vld [vmem:[#allocation3 + $0x848] sm:$0xff]
        %v585 = vld [vmem:[#allocation3 + $0x860] sm:$0xff]
        %v586 = vld [vmem:[#allocation3 + $0x868] sm:$0xff]
        %v587 = vld [vmem:[#allocation3 + $0x880] sm:$0xff]
        %v588 = vld [vmem:[#allocation3 + $0x888] sm:$0xff]
        %v589 = vld [vmem:[#allocation3 + $0x8a0] sm:$0xff]
        %v590 = vld [vmem:[#allocation3 + $0x8a8] sm:$0xff]
        %v591 = vld [vmem:[#allocation3 + $0x8c0] sm:$0xff]
        %v592 = vld [vmem:[#allocation3 + $0x8c8] sm:$0xff]
        %v593 = vld [vmem:[#allocation3 + $0x8e0] sm:$0xff]
        %v594 = vld [vmem:[#allocation3 + $0x8e8] sm:$0xff]
        %v595 = vld [vmem:[#allocation3 + $0x900] sm:$0xff]
        %v596 = vld [vmem:[#allocation3 + $0x908] sm:$0xff]
        %v597 = vld [vmem:[#allocation3 + $0x920] sm:$0xff]
        %v598 = vld [vmem:[#allocation3 + $0x928] sm:$0xff]
        %v599 = vld [vmem:[#allocation3 + $0x940] sm:$0xff]
        %v600 = vld [vmem:[#allocation3 + $0x948] sm:$0xff]
        %v601 = vld [vmem:[#allocation3 + $0x960] sm:$0xff]
        %v602 = vld [vmem:[#allocation3 + $0x968] sm:$0xff]
        %v603 = vld [vmem:[#allocation3 + $0x980] sm:$0xff]
        %v604 = vld [vmem:[#allocation3 + $0x988] sm:$0xff]
        %v605 = vld [vmem:[#allocation3 + $0x9a0] sm:$0xff]
        %v606 = vld [vmem:[#allocation3 + $0x9a8] sm:$0xff]
        %v607 = vld [vmem:[#allocation3 + $0x9c0] sm:$0xff]
        %v608 = vld [vmem:[#allocation3 + $0x9c8] sm:$0xff]
        %v609 = vld [vmem:[#allocation3 + $0x9e0] sm:$0xff]
        %v610 = vld [vmem:[#allocation3 + $0x9e8] sm:$0xff]
        %v611 = vld [vmem:[#allocation3 + $0xa00] sm:$0xff]
        %v612 = vld [vmem:[#allocation3 + $0xa08] sm:$0xff]
        %v613 = vld [vmem:[#allocation3 + $0x230] sm:$0xff]
        %v614 = vld [vmem:[#allocation3 + $0x238] sm:$0xff]
        %v615 = vld [vmem:[#allocation3 + $0x250] sm:$0xff]
        %v616 = vld [vmem:[#allocation3 + $0x258] sm:$0xff]
        %v617 = vld [vmem:[#allocation3 + $0x270] sm:$0xff]
        %v618 = vld [vmem:[#allocation3 + $0x278] sm:$0xff]
        %v619 = vld [vmem:[#allocation3 + $0x290] sm:$0xff]
        %v620 = vld [vmem:[#allocation3 + $0x298] sm:$0xff]
        %v621 = vld [vmem:[#allocation3 + $0x2b0] sm:$0xff]
        %v622 = vld [vmem:[#allocation3 + $0x2b8] sm:$0xff]
        %v623 = vld [vmem:[#allocation3 + $0x2d0] sm:$0xff]
        %v624 = vld [vmem:[#allocation3 + $0x2d8] sm:$0xff]
        %v625 = vld [vmem:[#allocation3 + $0x2f0] sm:$0xff]
        %v626 = vld [vmem:[#allocation3 + $0x2f8] sm:$0xff]
        %v627 = vld [vmem:[#allocation3 + $0x310] sm:$0xff]
        %v628 = vld [vmem:[#allocation3 + $0x318] sm:$0xff]
        %v629 = vld [vmem:[#allocation3 + $0x330] sm:$0xff]
        %v630 = vld [vmem:[#allocation3 + $0x338] sm:$0xff]
        %v631 = vld [vmem:[#allocation3 + $0x350] sm:$0xff]
        %v632 = vld [vmem:[#allocation3 + $0x358] sm:$0xff]
        %v633 = vld [vmem:[#allocation3 + $0x370] sm:$0xff]
        %v634 = vld [vmem:[#allocation3 + $0x378] sm:$0xff]
        %v635 = vld [vmem:[#allocation3 + $0x390] sm:$0xff]
        %v636 = vld [vmem:[#allocation3 + $0x398] sm:$0xff]
        %v637 = vld [vmem:[#allocation3 + $0x3b0] sm:$0xff]
        %v638 = vld [vmem:[#allocation3 + $0x3b8] sm:$0xff]
        %v639 = vld [vmem:[#allocation3 + $0x3d0] sm:$0xff]
        %v640 = vld [vmem:[#allocation3 + $0x3d8] sm:$0xff]
        %v641 = vld [vmem:[#allocation3 + $0x3f0] sm:$0xff]
        %v642 = vld [vmem:[#allocation3 + $0x3f8] sm:$0xff]
        %v643 = vld [vmem:[#allocation3 + $0x410] sm:$0xff]
        %v644 = vld [vmem:[#allocation3 + $0x418] sm:$0xff]
        %v645 = vld [vmem:[#allocation3 + $0x430] sm:$0xff]
        %v646 = vld [vmem:[#allocation3 + $0x438] sm:$0xff]
        %v647 = vld [vmem:[#allocation3 + $0x450] sm:$0xff]
        %v648 = vld [vmem:[#allocation3 + $0x458] sm:$0xff]
        %v649 = vld [vmem:[#allocation3 + $0x470] sm:$0xff]
        %v650 = vld [vmem:[#allocation3 + $0x478] sm:$0xff]
        %v651 = vld [vmem:[#allocation3 + $0x490] sm:$0xff]
        %v652 = vld [vmem:[#allocation3 + $0x498] sm:$0xff]
        %v653 = vld [vmem:[#allocation3 + $0x4b0] sm:$0xff]
        %v654 = vld [vmem:[#allocation3 + $0x4b8] sm:$0xff]
        %v655 = vld [vmem:[#allocation3 + $0x4d0] sm:$0xff]
        %v656 = vld [vmem:[#allocation3 + $0x4d8] sm:$0xff]
        %v657 = vld [vmem:[#allocation3 + $0x4f0] sm:$0xff]
        %v658 = vld [vmem:[#allocation3 + $0x4f8] sm:$0xff]
        %v659 = vld [vmem:[#allocation3 + $0x510] sm:$0xff]
        %v660 = vld [vmem:[#allocation3 + $0x518] sm:$0xff]
        %v661 = vld [vmem:[#allocation3 + $0x530] sm:$0xff]
        %v662 = vld [vmem:[#allocation3 + $0x538] sm:$0xff]
        %v663 = vld [vmem:[#allocation3 + $0x550] sm:$0xff]
        %v664 = vld [vmem:[#allocation3 + $0x558] sm:$0xff]
        %v665 = vld [vmem:[#allocation3 + $0x570] sm:$0xff]
        %v666 = vld [vmem:[#allocation3 + $0x578] sm:$0xff]
        %v667 = vld [vmem:[#allocation3 + $0x590] sm:$0xff]
        %v668 = vld [vmem:[#allocation3 + $0x598] sm:$0xff]
        %v669 = vld [vmem:[#allocation3 + $0x5b0] sm:$0xff]
        %v670 = vld [vmem:[#allocation3 + $0x5b8] sm:$0xff]
        %v671 = vld [vmem:[#allocation3 + $0x5d0] sm:$0xff]
        %v672 = vld [vmem:[#allocation3 + $0x5d8] sm:$0xff]
        %v673 = vld [vmem:[#allocation3 + $0x5f0] sm:$0xff]
        %v674 = vld [vmem:[#allocation3 + $0x5f8] sm:$0xff]
        %v675 = vld [vmem:[#allocation3 + $0x610] sm:$0xff]
        %v676 = vld [vmem:[#allocation3 + $0x618] sm:$0xff]
        %v677 = vld [vmem:[#allocation3 + $0x630] sm:$0xff]
        %v678 = vld [vmem:[#allocation3 + $0x638] sm:$0xff]
        %v679 = vld [vmem:[#allocation3 + $0x650] sm:$0xff]
        %v680 = vld [vmem:[#allocation3 + $0x658] sm:$0xff]
        %v681 = vld [vmem:[#allocation3 + $0x670] sm:$0xff]
        %v682 = vld [vmem:[#allocation3 + $0x678] sm:$0xff]
        %v683 = vld [vmem:[#allocation3 + $0x690] sm:$0xff]
        %v684 = vld [vmem:[#allocation3 + $0x698] sm:$0xff]
        %v685 = vld [vmem:[#allocation3 + $0x6b0] sm:$0xff]
        %v686 = vld [vmem:[#allocation3 + $0x6b8] sm:$0xff]
        %v687 = vld [vmem:[#allocation3 + $0x6d0] sm:$0xff]
        %v688 = vld [vmem:[#allocation3 + $0x6d8] sm:$0xff]
        %v689 = vld [vmem:[#allocation3 + $0x6f0] sm:$0xff]
        %v690 = vld [vmem:[#allocation3 + $0x6f8] sm:$0xff]
        %v691 = vld [vmem:[#allocation3 + $0x710] sm:$0xff]
        %v692 = vld [vmem:[#allocation3 + $0x718] sm:$0xff]
        %v693 = vld [vmem:[#allocation3 + $0x730] sm:$0xff]
        %v694 = vld [vmem:[#allocation3 + $0x738] sm:$0xff]
        %v695 = vld [vmem:[#allocation3 + $0x750] sm:$0xff]
        %v696 = vld [vmem:[#allocation3 + $0x758] sm:$0xff]
        %v697 = vld [vmem:[#allocation3 + $0x770] sm:$0xff]
        %v698 = vld [vmem:[#allocation3 + $0x778] sm:$0xff]
        %v699 = vld [vmem:[#allocation3 + $0x790] sm:$0xff]
        %v700 = vld [vmem:[#allocation3 + $0x798] sm:$0xff]
        %v701 = vld [vmem:[#allocation3 + $0x7b0] sm:$0xff]
        %v702 = vld [vmem:[#allocation3 + $0x7b8] sm:$0xff]
        %v703 = vld [vmem:[#allocation3 + $0x7d0] sm:$0xff]
        %v704 = vld [vmem:[#allocation3 + $0x7d8] sm:$0xff]
        %v705 = vld [vmem:[#allocation3 + $0x7f0] sm:$0xff]
        %v706 = vld [vmem:[#allocation3 + $0x7f8] sm:$0xff]
        %v707 = vld [vmem:[#allocation3 + $0x810] sm:$0xff]
        %v708 = vld [vmem:[#allocation3 + $0x818] sm:$0xff]
        %v709 = vld [vmem:[#allocation3 + $0x830] sm:$0xff]
        %v710 = vld [vmem:[#allocation3 + $0x838] sm:$0xff]
        %v711 = vld [vmem:[#allocation3 + $0x850] sm:$0xff]
        %v712 = vld [vmem:[#allocation3 + $0x858] sm:$0xff]
        %v713 = vld [vmem:[#allocation3 + $0x870] sm:$0xff]
        %v714 = vld [vmem:[#allocation3 + $0x878] sm:$0xff]
        %v715 = vld [vmem:[#allocation3 + $0x890] sm:$0xff]
        %v716 = vld [vmem:[#allocation3 + $0x898] sm:$0xff]
        %v717 = vld [vmem:[#allocation3 + $0x8b0] sm:$0xff]
        %v718 = vld [vmem:[#allocation3 + $0x8b8] sm:$0xff]
        %v719 = vld [vmem:[#allocation3 + $0x8d0] sm:$0xff]
        %v720 = vld [vmem:[#allocation3 + $0x8d8] sm:$0xff]
        %v721 = vld [vmem:[#allocation3 + $0x8f0] sm:$0xff]
        %v722 = vld [vmem:[#allocation3 + $0x8f8] sm:$0xff]
        %v723 = vld [vmem:[#allocation3 + $0x910] sm:$0xff]
        %v724 = vld [vmem:[#allocation3 + $0x918] sm:$0xff]
        %v725 = vld [vmem:[#allocation3 + $0x930] sm:$0xff]
        %v726 = vld [vmem:[#allocation3 + $0x938] sm:$0xff]
        %v727 = vld [vmem:[#allocation3 + $0x950] sm:$0xff]
        %v728 = vld [vmem:[#allocation3 + $0x958] sm:$0xff]
        %v729 = vld [vmem:[#allocation3 + $0x970] sm:$0xff]
        %v730 = vld [vmem:[#allocation3 + $0x978] sm:$0xff]
        %v731 = vld [vmem:[#allocation3 + $0x990] sm:$0xff]
        %v732 = vld [vmem:[#allocation3 + $0x998] sm:$0xff]
        %v733 = vld [vmem:[#allocation3 + $0x9b0] sm:$0xff]
        %v734 = vld [vmem:[#allocation3 + $0x9b8] sm:$0xff]
        %v735 = vld [vmem:[#allocation3 + $0x9d0] sm:$0xff]
        %v736 = vld [vmem:[#allocation3 + $0x9d8] sm:$0xff]
        %v737 = vld [vmem:[#allocation3 + $0x9f0] sm:$0xff]
        %v738 = vld [vmem:[#allocation3 + $0x9f8] sm:$0xff]
        %v739 = vld [vmem:[#allocation3 + $0xa10] sm:$0xff]
        %v740 = vld [vmem:[#allocation3 + $0xa18] sm:$0xff]
        %s741 = scalar_lea.vmem [#allocation3], 2592
        %v742 = vld [vmem:[%s741] ss:$8 sm:$0x3]
        %743 = vmatprep.subr.mxu0 %v486
        %744 = vmatpush1.msra.mxu0 %v485
        %745 = vmatprep.subr.mxu0 %v488
        %746 = vmatpush1.msra.mxu0 %v487
        %747 = vmatprep.subr.mxu0 %v490
        %748 = vmatpush1.msra.mxu0 %v489
        %749 = vmatprep.subr.mxu0 %v492
        %750 = vmatpush1.msra.mxu0 %v491
        %751 = vmatprep.subr.mxu0 %v494
        %752 = vmatpush1.msra.mxu0 %v493
        %753 = vmatprep.subr.mxu0 %v496
        %754 = vmatpush1.msra.mxu0 %v495
        %755 = vmatprep.subr.mxu0 %v498
        %756 = vmatpush1.msra.mxu0 %v497
        %757 = vmatprep.subr.mxu0 %v500
        %758 = vmatpush1.msra.mxu0 %v499
        %759 = vmatprep.subr.mxu0 %v502
        %760 = vmatpush1.msra.mxu0 %v501
        %761 = vmatprep.subr.mxu0 %v504
        %762 = vmatpush1.msra.mxu0 %v503
        %763 = vmatprep.subr.mxu0 %v506
        %764 = vmatpush1.msra.mxu0 %v505
        %765 = vmatprep.subr.mxu0 %v508
        %766 = vmatpush1.msra.mxu0 %v507
        %767 = vmatprep.subr.mxu0 %v510
        %768 = vmatpush1.msra.mxu0 %v509
        %769 = vmatprep.subr.mxu0 %v512
        %770 = vmatpush1.msra.mxu0 %v511
        %771 = vmatprep.subr.mxu0 %v514
        %772 = vmatpush1.msra.mxu0 %v513
        %773 = vmatprep.subr.mxu0 %v516
        %774 = vmatpush1.msra.mxu0 %v515
        %775 = vmatprep.subr.mxu0 %v518
        %776 = vmatpush1.msra.mxu0 %v517
        %777 = vmatprep.subr.mxu0 %v520
        %778 = vmatpush1.msra.mxu0 %v519
        %779 = vmatprep.subr.mxu0 %v522
        %780 = vmatpush1.msra.mxu0 %v521
        %781 = vmatprep.subr.mxu0 %v524
        %782 = vmatpush1.msra.mxu0 %v523
        %783 = vmatprep.subr.mxu0 %v526
        %784 = vmatpush1.msra.mxu0 %v525
        %785 = vmatprep.subr.mxu0 %v528
        %786 = vmatpush1.msra.mxu0 %v527
        %787 = vmatprep.subr.mxu0 %v530
        %788 = vmatpush1.msra.mxu0 %v529
        %789 = vmatprep.subr.mxu0 %v532
        %790 = vmatpush1.msra.mxu0 %v531
        %791 = vmatprep.subr.mxu0 %v534
        %792 = vmatpush1.msra.mxu0 %v533
        %793 = vmatprep.subr.mxu0 %v536
        %794 = vmatpush1.msra.mxu0 %v535
        %795 = vmatprep.subr.mxu0 %v538
        %796 = vmatpush1.msra.mxu0 %v537
        %797 = vmatprep.subr.mxu0 %v540
        %798 = vmatpush1.msra.mxu0 %v539
        %799 = vmatprep.subr.mxu0 %v542
        %800 = vmatpush1.msra.mxu0 %v541
        %801 = vmatprep.subr.mxu0 %v544
        %802 = vmatpush1.msra.mxu0 %v543
        %803 = vmatprep.subr.mxu0 %v546
        %804 = vmatpush1.msra.mxu0 %v545
        %805 = vmatprep.subr.mxu0 %v548
        %806 = vmatpush1.msra.mxu0 %v547
        %807 = vmatprep.mubr.f32.mxu0 %v470
        %808 = vmatmul.mubr.f32.gmra.mrb[0].mxu0 %v469
        %v809 = vpop.f32.mrb[0].mxu0
        %v810 = vadd.f32 0.0, %v809
        %v811 = vpop.f32.mrb[0].mxu0
        %v812 = vadd.f32 0.0, %v811
        %813 = vmatprep.mubr.f32.mxu0 %v474
        %814 = vmatmul.mubr.f32.gmra.mrb[0].mxu0 %v473
        %v815 = vpop.f32.mrb[0].mxu0
        %v816 = vadd.f32 0.0, %v815
        %v817 = vpop.f32.mrb[0].mxu0
        %v818 = vadd.f32 0.0, %v817
        %819 = vmatprep.mubr.f32.mxu0 %v478
        %820 = vmatmul.mubr.f32.gmra.mrb[0].mxu0 %v477
        %v821 = vpop.f32.mrb[0].mxu0
        %v822 = vadd.f32 0.0, %v821
        %v823 = vpop.f32.mrb[0].mxu0
        %v824 = vadd.f32 0.0, %v823
        %825 = vmatprep.mubr.f32.mxu0 %v482
        %826 = vmatmul.mubr.f32.gmra.mrb[0].mxu0 %v481
        %v827 = vpop.f32.mrb[0].mxu0
        %v828 = vadd.f32 0.0, %v827
        %v829 = vpop.f32.mrb[0].mxu0
        %v830 = vadd.f32 0.0, %v829
        %831 = vdwg.mxu0
        %832 = vmatprep.subr.mxu0 %v550
        %833 = vmatpush1.msra.mxu0 %v549
        %834 = vmatprep.subr.mxu0 %v552
        %835 = vmatpush1.msra.mxu0 %v551
        %836 = vmatprep.subr.mxu0 %v554
        %837 = vmatpush1.msra.mxu0 %v553
        %838 = vmatprep.subr.mxu0 %v556
        %839 = vmatpush1.msra.mxu0 %v555
        %840 = vmatprep.subr.mxu0 %v558
        %841 = vmatpush1.msra.mxu0 %v557
        %842 = vmatprep.subr.mxu0 %v560
        %843 = vmatpush1.msra.mxu0 %v559
        %844 = vmatprep.subr.mxu0 %v562
        %845 = vmatpush1.msra.mxu0 %v561
        %846 = vmatprep.subr.mxu0 %v564
        %847 = vmatpush1.msra.mxu0 %v563
        %848 = vmatprep.subr.mxu0 %v566
        %849 = vmatpush1.msra.mxu0 %v565
        %850 = vmatprep.subr.mxu0 %v568
        %851 = vmatpush1.msra.mxu0 %v567
        %852 = vmatprep.subr.mxu0 %v570
        %853 = vmatpush1.msra.mxu0 %v569
        %854 = vmatprep.subr.mxu0 %v572
        %855 = vmatpush1.msra.mxu0 %v571
        %856 = vmatprep.subr.mxu0 %v574
        %857 = vmatpush1.msra.mxu0 %v573
        %858 = vmatprep.subr.mxu0 %v576
        %859 = vmatpush1.msra.mxu0 %v575
        %860 = vmatprep.subr.mxu0 %v578
        %861 = vmatpush1.msra.mxu0 %v577
        %862 = vmatprep.subr.mxu0 %v580
        %863 = vmatpush1.msra.mxu0 %v579
        %864 = vmatprep.subr.mxu0 %v582
        %865 = vmatpush1.msra.mxu0 %v581
        %866 = vmatprep.subr.mxu0 %v584
        %867 = vmatpush1.msra.mxu0 %v583
        %868 = vmatprep.subr.mxu0 %v586
        %869 = vmatpush1.msra.mxu0 %v585
        %870 = vmatprep.subr.mxu0 %v588
        %871 = vmatpush1.msra.mxu0 %v587
        %872 = vmatprep.subr.mxu0 %v590
        %873 = vmatpush1.msra.mxu0 %v589
        %874 = vmatprep.subr.mxu0 %v592
        %875 = vmatpush1.msra.mxu0 %v591
        %876 = vmatprep.subr.mxu0 %v594
        %877 = vmatpush1.msra.mxu0 %v593
        %878 = vmatprep.subr.mxu0 %v596
        %879 = vmatpush1.msra.mxu0 %v595
        %880 = vmatprep.subr.mxu0 %v598
        %881 = vmatpush1.msra.mxu0 %v597
        %882 = vmatprep.subr.mxu0 %v600
        %883 = vmatpush1.msra.mxu0 %v599
        %884 = vmatprep.subr.mxu0 %v602
        %885 = vmatpush1.msra.mxu0 %v601
        %886 = vmatprep.subr.mxu0 %v604
        %887 = vmatpush1.msra.mxu0 %v603
        %888 = vmatprep.subr.mxu0 %v606
        %889 = vmatpush1.msra.mxu0 %v605
        %890 = vmatprep.subr.mxu0 %v608
        %891 = vmatpush1.msra.mxu0 %v607
        %892 = vmatprep.subr.mxu0 %v610
        %893 = vmatpush1.msra.mxu0 %v609
        %894 = vmatprep.subr.mxu0 %v612
        %895 = vmatpush1.msra.mxu0 %v611
        %896 = vmatprep.mubr.f32.mxu0 %v472
        %897 = vmatmul.mubr.f32.gmra.mrb[0].mxu0 %v471
        %v898 = vpop.f32.mrb[0].mxu0
        %v899 = vadd.f32 %v810, %v898
        %v900 = vpop.f32.mrb[0].mxu0
        %v901 = vadd.f32 %v812, %v900
        %902 = vmatprep.mubr.f32.mxu0 %v476
        %903 = vmatmul.mubr.f32.gmra.mrb[0].mxu0 %v475
        %v904 = vpop.f32.mrb[0].mxu0
        %v905 = vadd.f32 %v816, %v904
        %v906 = vpop.f32.mrb[0].mxu0
        %v907 = vadd.f32 %v818, %v906
        %908 = vmatprep.mubr.f32.mxu0 %v480
        %909 = vmatmul.mubr.f32.gmra.mrb[0].mxu0 %v479
        %v910 = vpop.f32.mrb[0].mxu0
        %v911 = vadd.f32 %v822, %v910
        %v912 = vpop.f32.mrb[0].mxu0
        %v913 = vadd.f32 %v824, %v912
        %914 = vmatprep.mubr.f32.mxu0 %v484
        %915 = vmatmul.mubr.f32.gmra.mrb[0].mxu0 %v483
        %v916 = vpop.f32.mrb[0].mxu0
        %v917 = vadd.f32 %v828, %v916
        %v918 = vpop.f32.mrb[0].mxu0
        %v919 = vadd.f32 %v830, %v918
        %920 = vdwg.mxu0
        %v921 = vmax.f32 %v899, %v911
        %v922 = vmax.f32 %v905, %v917
        %v923 = vmax.f32 %v921, %v922
        %v924 = vrot.slane %v923, 4
        %v925 = vmax.f32 %v923, %v924
        %v926 = vrot.slane %v925, 2
        %v927 = vmax.f32 %v925, %v926
        %v928 = vrot.slane %v927, 1
        %v929 = vmax.f32 %v927, %v928
        %v930 = vmax.f32 %v901, %v913
        %v931 = vmax.f32 %v907, %v919
        %v932 = vmax.f32 %v930, %v931
        %v933 = vrot.slane %v932, 4
        %v934 = vmax.f32 %v932, %v933
        %v935 = vrot.slane %v934, 2
        %v936 = vmax.f32 %v934, %v935
        %v937 = vrot.slane %v936, 1
        %v938 = vmax.f32 %v936, %v937
        %939 = vmatprep.subr.mxu0 %v614
        %940 = vmatpush1.msra.mxu0 %v613
        %941 = vmatprep.subr.mxu0 %v616
        %942 = vmatpush1.msra.mxu0 %v615
        %943 = vmatprep.subr.mxu0 %v618
        %944 = vmatpush1.msra.mxu0 %v617
        %945 = vmatprep.subr.mxu0 %v620
        %946 = vmatpush1.msra.mxu0 %v619
        %947 = vmatprep.subr.mxu0 %v622
        %948 = vmatpush1.msra.mxu0 %v621
        %949 = vmatprep.subr.mxu0 %v624
        %950 = vmatpush1.msra.mxu0 %v623
        %951 = vmatprep.subr.mxu0 %v626
        %952 = vmatpush1.msra.mxu0 %v625
        %953 = vmatprep.subr.mxu0 %v628
        %954 = vmatpush1.msra.mxu0 %v627
        %955 = vmatprep.subr.mxu0 %v630
        %956 = vmatpush1.msra.mxu0 %v629
        %957 = vmatprep.subr.mxu0 %v632
        %958 = vmatpush1.msra.mxu0 %v631
        %959 = vmatprep.subr.mxu0 %v634
        %960 = vmatpush1.msra.mxu0 %v633
        %961 = vmatprep.subr.mxu0 %v636
        %962 = vmatpush1.msra.mxu0 %v635
        %963 = vmatprep.subr.mxu0 %v638
        %964 = vmatpush1.msra.mxu0 %v637
        %965 = vmatprep.subr.mxu0 %v640
        %966 = vmatpush1.msra.mxu0 %v639
        %967 = vmatprep.subr.mxu0 %v642
        %968 = vmatpush1.msra.mxu0 %v641
        %969 = vmatprep.subr.mxu0 %v644
        %970 = vmatpush1.msra.mxu0 %v643
        %971 = vmatprep.subr.mxu0 %v646
        %972 = vmatpush1.msra.mxu0 %v645
        %973 = vmatprep.subr.mxu0 %v648
        %974 = vmatpush1.msra.mxu0 %v647
        %975 = vmatprep.subr.mxu0 %v650
        %976 = vmatpush1.msra.mxu0 %v649
        %977 = vmatprep.subr.mxu0 %v652
        %978 = vmatpush1.msra.mxu0 %v651
        %979 = vmatprep.subr.mxu0 %v654
        %980 = vmatpush1.msra.mxu0 %v653
        %981 = vmatprep.subr.mxu0 %v656
        %982 = vmatpush1.msra.mxu0 %v655
        %983 = vmatprep.subr.mxu0 %v658
        %984 = vmatpush1.msra.mxu0 %v657
        %985 = vmatprep.subr.mxu0 %v660
        %986 = vmatpush1.msra.mxu0 %v659
        %987 = vmatprep.subr.mxu0 %v662
        %988 = vmatpush1.msra.mxu0 %v661
        %989 = vmatprep.subr.mxu0 %v664
        %990 = vmatpush1.msra.mxu0 %v663
        %991 = vmatprep.subr.mxu0 %v666
        %992 = vmatpush1.msra.mxu0 %v665
        %993 = vmatprep.subr.mxu0 %v668
        %994 = vmatpush1.msra.mxu0 %v667
        %995 = vmatprep.subr.mxu0 %v670
        %996 = vmatpush1.msra.mxu0 %v669
        %997 = vmatprep.subr.mxu0 %v672
        %998 = vmatpush1.msra.mxu0 %v671
        %999 = vmatprep.subr.mxu0 %v674
        %1000 = vmatpush1.msra.mxu0 %v673
        %1001 = vmatprep.subr.mxu0 %v676
        %1002 = vmatpush1.msra.mxu0 %v675
        %1003 = vmatprep.mubr.f32.mxu0 %v470
        %1004 = vmatmul.mubr.f32.gmra.mrb[0].mxu0 %v469
        %v1005 = vpop.f32.mrb[0].mxu0
        %v1006 = vadd.f32 %v929, %v1005
        %v1007 = vpop.f32.mrb[0].mxu0
        %v1008 = vadd.f32 %v938, %v1007
        %1009 = vmatprep.mubr.f32.mxu0 %v474
        %1010 = vmatmul.mubr.f32.gmra.mrb[0].mxu0 %v473
        %v1011 = vpop.f32.mrb[0].mxu0
        %v1012 = vadd.f32 %v929, %v1011
        %v1013 = vpop.f32.mrb[0].mxu0
        %v1014 = vadd.f32 %v938, %v1013
        %1015 = vmatprep.mubr.f32.mxu0 %v478
        %1016 = vmatmul.mubr.f32.gmra.mrb[0].mxu0 %v477
        %v1017 = vpop.f32.mrb[0].mxu0
        %v1018 = vadd.f32 %v929, %v1017
        %v1019 = vpop.f32.mrb[0].mxu0
        %v1020 = vadd.f32 %v938, %v1019
        %1021 = vmatprep.mubr.f32.mxu0 %v482
        %1022 = vmatmul.mubr.f32.gmra.mrb[0].mxu0 %v481
        %v1023 = vpop.f32.mrb[0].mxu0
        %v1024 = vadd.f32 %v929, %v1023
        %v1025 = vpop.f32.mrb[0].mxu0
        %v1026 = vadd.f32 %v938, %v1025
        %1027 = vdwg.mxu0
        %1028 = vmatprep.subr.mxu0 %v678
        %1029 = vmatpush1.msra.mxu0 %v677
        %1030 = vmatprep.subr.mxu0 %v680
        %1031 = vmatpush1.msra.mxu0 %v679
        %1032 = vmatprep.subr.mxu0 %v682
        %1033 = vmatpush1.msra.mxu0 %v681
        %1034 = vmatprep.subr.mxu0 %v684
        %1035 = vmatpush1.msra.mxu0 %v683
        %1036 = vmatprep.subr.mxu0 %v686
        %1037 = vmatpush1.msra.mxu0 %v685
        %1038 = vmatprep.subr.mxu0 %v688
        %1039 = vmatpush1.msra.mxu0 %v687
        %1040 = vmatprep.subr.mxu0 %v690
        %1041 = vmatpush1.msra.mxu0 %v689
        %1042 = vmatprep.subr.mxu0 %v692
        %1043 = vmatpush1.msra.mxu0 %v691
        %1044 = vmatprep.subr.mxu0 %v694
        %1045 = vmatpush1.msra.mxu0 %v693
        %1046 = vmatprep.subr.mxu0 %v696
        %1047 = vmatpush1.msra.mxu0 %v695
        %1048 = vmatprep.subr.mxu0 %v698
        %1049 = vmatpush1.msra.mxu0 %v697
        %1050 = vmatprep.subr.mxu0 %v700
        %1051 = vmatpush1.msra.mxu0 %v699
        %1052 = vmatprep.subr.mxu0 %v702
        %1053 = vmatpush1.msra.mxu0 %v701
        %1054 = vmatprep.subr.mxu0 %v704
        %1055 = vmatpush1.msra.mxu0 %v703
        %1056 = vmatprep.subr.mxu0 %v706
        %1057 = vmatpush1.msra.mxu0 %v705
        %1058 = vmatprep.subr.mxu0 %v708
        %1059 = vmatpush1.msra.mxu0 %v707
        %1060 = vmatprep.subr.mxu0 %v710
        %1061 = vmatpush1.msra.mxu0 %v709
        %1062 = vmatprep.subr.mxu0 %v712
        %1063 = vmatpush1.msra.mxu0 %v711
        %1064 = vmatprep.subr.mxu0 %v714
        %1065 = vmatpush1.msra.mxu0 %v713
        %1066 = vmatprep.subr.mxu0 %v716
        %1067 = vmatpush1.msra.mxu0 %v715
        %1068 = vmatprep.subr.mxu0 %v718
        %1069 = vmatpush1.msra.mxu0 %v717
        %1070 = vmatprep.subr.mxu0 %v720
        %1071 = vmatpush1.msra.mxu0 %v719
        %1072 = vmatprep.subr.mxu0 %v722
        %1073 = vmatpush1.msra.mxu0 %v721
        %1074 = vmatprep.subr.mxu0 %v724
        %1075 = vmatpush1.msra.mxu0 %v723
        %1076 = vmatprep.subr.mxu0 %v726
        %1077 = vmatpush1.msra.mxu0 %v725
        %1078 = vmatprep.subr.mxu0 %v728
        %1079 = vmatpush1.msra.mxu0 %v727
        %1080 = vmatprep.subr.mxu0 %v730
        %1081 = vmatpush1.msra.mxu0 %v729
        %1082 = vmatprep.subr.mxu0 %v732
        %1083 = vmatpush1.msra.mxu0 %v731
        %1084 = vmatprep.subr.mxu0 %v734
        %1085 = vmatpush1.msra.mxu0 %v733
        %1086 = vmatprep.subr.mxu0 %v736
        %1087 = vmatpush1.msra.mxu0 %v735
        %1088 = vmatprep.subr.mxu0 %v738
        %1089 = vmatpush1.msra.mxu0 %v737
        %1090 = vmatprep.subr.mxu0 %v740
        %1091 = vmatpush1.msra.mxu0 %v739
        %1092 = vmatprep.mubr.f32.mxu0 %v472
        %1093 = vmatmul.mubr.f32.gmra.mrb[0].mxu0 %v471
        %v1094 = vpop.f32.mrb[0].mxu0
        %v1095 = vadd.f32 %v1006, %v1094
        %v1096 = vpop.f32.mrb[0].mxu0
        %v1097 = vadd.f32 %v1008, %v1096
        %1098 = vmatprep.mubr.f32.mxu0 %v476
        %1099 = vmatmul.mubr.f32.gmra.mrb[0].mxu0 %v475
        %v1100 = vpop.f32.mrb[0].mxu0
        %v1101 = vadd.f32 %v1012, %v1100
        %v1102 = vpop.f32.mrb[0].mxu0
        %v1103 = vadd.f32 %v1014, %v1102
        %1104 = vmatprep.mubr.f32.mxu0 %v480
        %1105 = vmatmul.mubr.f32.gmra.mrb[0].mxu0 %v479
        %v1106 = vpop.f32.mrb[0].mxu0
        %v1107 = vadd.f32 %v1018, %v1106
        %v1108 = vpop.f32.mrb[0].mxu0
        %v1109 = vadd.f32 %v1020, %v1108
        %1110 = vmatprep.mubr.f32.mxu0 %v484
        %1111 = vmatmul.mubr.f32.gmra.mrb[0].mxu0 %v483
        %v1112 = vpop.f32.mrb[0].mxu0
        %v1113 = vadd.f32 %v1024, %v1112
        %v1114 = vpop.f32.mrb[0].mxu0
        %v1115 = vadd.f32 %v1026, %v1114
        %1116 = vdwg.mxu0
        %v1118 = vlaneseq
        %v1119 = vshrl.u32 %v1118, 7
        %v1120 = vsub.s32 0, %v1119
        %v1121 = vrot.slane %v742, %v1120
        %v1122 = vlaneseq
        %v1123 = vshrl.u32 %v1122, 7
        %v1124 = vsub.s32 1, %v1123
        %v1125 = vrot.slane %v742, %v1124
        %v1128 = vadd.f32 %v1095, %v1121
        %v1129 = vadd.f32 %v1097, %v1125
        %v1130 = vadd.f32 %v1101, %v1121
        %v1131 = vadd.f32 %v1103, %v1125
        %v1132 = vadd.f32 %v1107, %v1121
        %v1133 = vadd.f32 %v1109, %v1125
        %v1134 = vadd.f32 %v1113, %v1121
        %v1135 = vadd.f32 %v1115, %v1125
        %v1136 = vtanh.pop %v1128
        %v1137 = vtanh.pop %v1129
        %v1138 = vtanh.pop %v1130
        %v1139 = vtanh.pop %v1131
        %v1140 = vtanh.pop %v1132
        %v1141 = vtanh.pop %v1133
        %v1142 = vtanh.pop %v1134
        %v1143 = vtanh.pop %v1135
        %1144 = vst [vmem:[%s198] sm:$0xff] %v1136
        %1145 = vst [vmem:[%s198 + $0x8] sm:$0xff] %v1137
        %1146 = vst [vmem:[%s198 + $0x10] sm:$0xff] %v1138
        %1147 = vst [vmem:[%s198 + $0x18] sm:$0xff] %v1139
        %1148 = vst [vmem:[%s198 + $0x20] sm:$0xff] %v1140
        %1149 = vst [vmem:[%s198 + $0x28] sm:$0xff] %v1141
        %1150 = vst [vmem:[%s198 + $0x30] sm:$0xff] %v1142
        %1151 = vst [vmem:[%s198 + $0x38] sm:$0xff] %v1143
        %s1152 = sand.u32 %s69, 1
        %s1153 = sand.u32 %s69, 1
        %s1154 = smul.addr %s1153, 64
        %s1155 = scalar_lea.vmem [#allocation5], %s1154
        // Predicated region
        $region71: #{deepsets_forward.1} parent=61 // pred_check
          %p1156 = pneg %p79
        $region72: #{deepsets_forward.1} parent=61 // pred_check_branch
          %1158 = sbr.rel (%p1156) target = $region74
        $region73: #{deepsets_forward.1} parent=61 // pred_region
          %s1159 = smul.u32 2, %s14
          %s1160 = smul.addr %s1159, 8
          %s1161 = scalar_lea.vmem %s2, %s1160
          // Predicated region
          $region75: #{deepsets_forward.1} parent=73 // pred_check
            _
          $region76: #{deepsets_forward.1} parent=73 // pred_check_branch
            %1163 = sbr.rel (0) target = $region78
          $region77: #{deepsets_forward.1} parent=73 // pred_region
            // Predicated region
            $region79: #{deepsets_forward.1} parent=77 // pred_check
              _
            $region80: #{deepsets_forward.1} parent=77 // pred_check_branch
              %1165 = sbr.rel (0) target = $region82
            $region81: #{deepsets_forward.1} parent=77 // pred_region
              loop: start=0, step=1, limit=1
              $region83: #{deepsets_forward.1} parent=81 // loop_pre_header
                _
              $region84: #{deepsets_forward.1} parent=81 // loop_header
                %s1167 = sphi 0, %s1171
                %p1168 = scmp.ge.s32.totalorder %s1167, 1
                %s1172 = sphi %s1155, %s1155
                %s1173 = sphi %s1161, %s1161
              $region85: #{deepsets_forward.1} parent=81 // loop_header_branch
                %1170 = sbr.rel (%p1168) target = $region89
              $region86: #{deepsets_forward.1} parent=81 // loop_body
                %v1174 = vld [vmem:[%s1172] sm:$0xff]
                %1175 = vst [vmem:[%s1173] sm:$0xff] %v1174
                %v1176 = vld [vmem:[%s1172 + $0x8] sm:$0xff]
                %1177 = vst [vmem:[%s1173 + $0x8] sm:$0xff] %v1176
                %v1178 = vld [vmem:[%s1172 + $0x10] sm:$0xff]
                %1179 = vst [vmem:[%s1173 + $0x20] sm:$0xff] %v1178
                %v1180 = vld [vmem:[%s1172 + $0x18] sm:$0xff]
                %1181 = vst [vmem:[%s1173 + $0x28] sm:$0xff] %v1180
                %v1182 = vld [vmem:[%s1172 + $0x20] sm:$0xff]
                %1183 = vst [vmem:[%s1173 + $0x40] sm:$0xff] %v1182
                %v1184 = vld [vmem:[%s1172 + $0x28] sm:$0xff]
                %1185 = vst [vmem:[%s1173 + $0x48] sm:$0xff] %v1184
                %v1186 = vld [vmem:[%s1172 + $0x30] sm:$0xff]
                %1187 = vst [vmem:[%s1173 + $0x60] sm:$0xff] %v1186
                %v1188 = vld [vmem:[%s1172 + $0x38] sm:$0xff]
                %1189 = vst [vmem:[%s1173 + $0x68] sm:$0xff] %v1188
              $region87: #{deepsets_forward.1} parent=81 // loop_footer
                %s1171 = sadd.s32 1, %s1167
              $region88: #{deepsets_forward.1} parent=81 // loop_footer_branch
                %1166 = sbr.rel target = $region84
              $region89: #{deepsets_forward.1} parent=81 // loop_exit
                _
            $region82: #{deepsets_forward.1} parent=77 // pred_fallthru
              _
            // Predicated region
            $region90: #{deepsets_forward.1} parent=77 // pred_check
              _
            $region91: #{deepsets_forward.1} parent=77 // pred_check_branch
              %1191 = sbr.rel target = $region93
            $region92: #{deepsets_forward.1} parent=77 // pred_region
              _
            $region93: #{deepsets_forward.1} parent=77 // pred_fallthru
              _
          $region78: #{deepsets_forward.1} parent=73 // pred_fallthru
            _
          %1192 = vnop
        $region74: #{deepsets_forward.1} parent=61 // pred_fallthru
          _
      $region62: #{deepsets_forward.1} parent=5 // pred_fallthru
        _
      %p1193 = scmp.le.s32.totalorder 2, %s9
      // Predicated region
      $region94: #{deepsets_forward.1} parent=5 // pred_check
        %p1194 = pneg %p1193
      $region95: #{deepsets_forward.1} parent=5 // pred_check_branch
        %1196 = sbr.rel (%p1194) target = $region97
      $region96: #{deepsets_forward.1} parent=5 // pred_region
        %s1197 = ssub.s32 %s9, 2
        // Predicated region
        $region98: #{deepsets_forward.1} parent=96 // pred_check
          %p1198 = pneg %p85
        $region99: #{deepsets_forward.1} parent=96 // pred_check_branch
          %1200 = sbr.rel (%p1198) target = $region101
        $region100: #{deepsets_forward.1} parent=96 // pred_region
          %s1201 = sand.u32 %s70, 1
          %s1202 = sand.u32 %s70, 1
          %s1203 = smul.addr %s1202, 64
          %s1204 = scalar_lea.vmem [#allocation5], %s1203
        $region101: #{deepsets_forward.1} parent=96 // pred_fallthru
          _
      $region97: #{deepsets_forward.1} parent=5 // pred_fallthru
        _
    $region6: #{deepsets_forward.1} parent=1 // loop_footer
      %s13 = sadd.s32 1, %s9
    $region7: #{deepsets_forward.1} parent=1 // loop_footer_branch
      %8 = sbr.rel target = $region3
    $region8: #{deepsets_forward.1} parent=1 // loop_exit
      _
    %1205 = vsyncpa [#allocation4], 1
    %s1206 = scalar_lea.sflag [#allocation4], 1
    %1207 = vsyncpa %s1206, 1

</llo_original>
